<compile_context>
chip_gen: v6e
topology: v6e:2x2x1
jax: 0.10.0
libtpu: 0.0.40
codegen_flags: <defaults>
</compile_context>

<pallas_src>
import math
from functools import partial

import jax
import jax.numpy as jnp
from jax.experimental import pallas as pl
from jax.experimental.pallas import tpu as pltpu

# ---- ArcMargin hyper-parameters (PyTorch module defaults) --------------------
S = 30.0
M = 0.5
COS_M = math.cos(M)
SIN_M = math.sin(M)
TH = math.cos(math.pi - M)
MM = math.sin(math.pi - M) * M
EPS = 1e-12  # F.normalize default eps


def _row_inv_norm(x):
    """1 / max(||row||_2, eps)  via one rsqrt per row (EUP work = rows, not rows*D)."""
    sumsq = jnp.sum(x * x, axis=1, keepdims=True)
    return jax.lax.rsqrt(jnp.maximum(sumsq, EPS * EPS))


def _cosine_tile(x_ref, w_ref):
    """Normalized rows of x and W-tile, contracted on the MXU without a transpose."""
    x = x_ref[...].astype(jnp.float32)            # (B, D)
    w = w_ref[...].astype(jnp.float32)            # (TC, D)
    xn = x * _row_inv_norm(x)
    wn = w * _row_inv_norm(w)
    # TODO(synk): for very large heads, cast xn/wn to bf16 here (halves W HBM
    # traffic and VMEM) and loosen the output tolerance accordingly.
    return jax.lax.dot_general(
        xn, wn,
        dimension_numbers=(((1,), (1,)), ((), ())),   # contract dim 1 of both
        preferred_element_type=jnp.float32,
        precision=jax.lax.Precision.HIGHEST,
    )                                              # (B, TC)


def _arc_margin_train_kernel(label_ref, x_ref, w_ref, out_ref, *, easy_margin):
    j = pl.program_id(0)
    cosine = _cosine_tile(x_ref, w_ref)            # (B, TC) f32
    label = label_ref[...]                         # (B, 1) int32

    b, tc = cosine.shape
    class_ids = j * tc + jax.lax.broadcasted_iota(jnp.int32, (b, tc), dimension=1)
    mask = class_ids == label                      # (B, TC) bool, <=1 true/row

    # Margin math only on the label column (B elements, not B*TC).
    cos_sel = jnp.sum(jnp.where(mask, cosine, 0.0), axis=1, keepdims=True)  # (B,1)
    sine = jnp.sqrt(jnp.maximum(1.0 - cos_sel * cos_sel, 0.0))
    phi = cos_sel * COS_M - sine * SIN_M
    if easy_margin:
        phi = jnp.where(cos_sel > 0.0, phi, cos_sel)
    else:
        phi = jnp.where(cos_sel > TH, phi, cos_sel - MM)
    # Rows whose label is not in this tile get an all-false mask, so the
    # (meaningless) phi for them is never selected.
    out_ref[...] = (jnp.where(mask, phi, cosine) * S).astype(out_ref.dtype)


def _arc_margin_infer_kernel(x_ref, w_ref, out_ref):
    cosine = _cosine_tile(x_ref, w_ref)
    out_ref[...] = (cosine * S).astype(out_ref.dtype)


def _round_up(a, b):
    return (a + b - 1) // b * b


def arc_margin_product(x, weight, label=None, *, easy_margin=False, tc=512):
    """Forward of ArcMarginProduct.

    x:      (B, in_features) float
    weight: (out_features, in_features) float
    label:  optional (B,) int
    tc:     class-tile size (rounded to a multiple of 128).  ~512-2048 on v7x
            (64 MiB VMEM), up to ~4096-8192 on v5e/v6e (128 MiB VMEM).
    """
    B, D = x.shape
    C, D2 = weight.shape
    assert D == D2

    x = x.astype(jnp.float32)
    weight = weight.astype(jnp.float32)

    # Lane-align the class tile and sublane-align the batch; pad and slice back.
    tc = _round_up(min(tc, _round_up(C, 128)), 128)
    c_pad = _round_up(C, tc)
    b_pad = _round_up(B, 8)

    x_p = x if b_pad == B else jnp.pad(x, ((0, b_pad - B), (0, 0)))
    w_p = weight if c_pad == C else jnp.pad(weight, ((0, c_pad - C), (0, 0)))

    grid = (pl.cdiv(c_pad, tc),)

    # Double-buffered W tile + double-buffered out tile + resident x/label,
    # with generous headroom; capped well below v7x's 64 MiB physical VMEM.
    est_bytes = (2 * tc * D + 2 * b_pad * tc + b_pad * D + 2 * b_pad) * 4
    cparams = pltpu.CompilerParams(
        dimension_semantics=("parallel",),
        vmem_limit_bytes=int(min(max(4 * est_bytes, 8 << 20), 48 << 20)),
    )

    x_spec = pl.BlockSpec((b_pad, D), lambda j: (0, 0))
    w_spec = pl.BlockSpec((tc, D), lambda j: (j, 0))
    out_spec = pl.BlockSpec((b_pad, tc), lambda j: (0, j))

    if label is None:
        out = pl.pallas_call(
            _arc_margin_infer_kernel,
            out_shape=jax.ShapeDtypeStruct((b_pad, c_pad), jnp.float32),
            grid=grid,
            in_specs=[x_spec, w_spec],
            out_specs=out_spec,
            compiler_params=cparams,
        )(x_p, w_p)
        return out[:B, :C]

    label = label.astype(jnp.int32)
    label_p = label if b_pad == B else jnp.pad(label, (0, b_pad - B))
    label2d = label_p.reshape(b_pad, 1)

    out = pl.pallas_call(
        partial(_arc_margin_train_kernel, easy_margin=easy_margin),
        out_shape=jax.ShapeDtypeStruct((b_pad, c_pad), jnp.float32),
        grid=grid,
        in_specs=[
            pl.BlockSpec((b_pad, 1), lambda j: (0, 0)),   # label, resident
            x_spec,
            w_spec,
        ],
        out_specs=out_spec,
        compiler_params=cparams,
    )(label2d, x_p, w_p)

    # cosine[i, label[i]]: B x D row-wise dot in the wrapper so the class grid
    # axis stays parallel (no cross-tile accumulation / race on v7x).
    xn = x * _row_inv_norm(x)
    w_sel = weight[label]                                  # (B, D) gather
    wn = w_sel * _row_inv_norm(w_sel)
    cos_at_label = jnp.sum(xn * wn, axis=1)

    return out[:B, :C], cos_at_label


# ----------------------------- test harness ----------------------------------
def _xavier_uniform(key, shape):
    fan_out, fan_in = shape
    bound = math.sqrt(6.0 / (fan_in + fan_out))
    return jax.random.uniform(key, shape, jnp.float32, -bound, bound)


def _reference(x, w, label):
    xn = x / jnp.maximum(jnp.linalg.norm(x, axis=1, keepdims=True), EPS)
    wn = w / jnp.maximum(jnp.linalg.norm(w, axis=1, keepdims=True), EPS)
    cosine = jnp.einsum("bd,cd->bc", xn, wn, precision=jax.lax.Precision.HIGHEST)
    sine = jnp.sqrt(jnp.clip(1.0 - cosine**2, 0.0, 1.0))
    phi = cosine * COS_M - sine * SIN_M
    phi = jnp.where(cosine > TH, phi, cosine - MM)
    one_hot = jax.nn.one_hot(label, cosine.shape[1], dtype=jnp.float32)
    out = (one_hot * phi + (1.0 - one_hot) * cosine) * S
    cos_lab = cosine[jnp.arange(cosine.shape[0]), label]
    return out, cos_lab, cosine * S


if __name__ == "__main__":
    key = jax.random.PRNGKey(0)
    kx, kw, kl = jax.random.split(key, 3)

    B = 8              # batch
    in_features = 64
    out_features = 200  # not a multiple of 128 -> exercises padding; tc=128 -> 2 tiles

    x = jax.random.normal(kx, (B, in_features), jnp.float32)
    weight = _xavier_uniform(kw, (out_features, in_features))
    label = jax.random.randint(kl, (B,), 0, out_features, jnp.int32)

    # training path (label provided): (scaled logits, cosine at label)
    out, cos_at_label = arc_margin_product(x, weight, label, tc=128)
    out = jax.block_until_ready(out)
    cos_at_label = jax.block_until_ready(cos_at_label)

    # inference path (no label)
    out_infer = jax.block_until_ready(arc_margin_product(x, weight, tc=128))

    # correctness check against a pure-JAX reference
    ref_out, ref_cos, ref_infer = _reference(x, weight, label)
    assert out.shape == (B, out_features)
    assert out_infer.shape == (B, out_features)
    assert jnp.allclose(out, ref_out, atol=1e-4, rtol=1e-4)
    assert jnp.allclose(cos_at_label, ref_cos, atol=1e-5, rtol=1e-5)
    assert jnp.allclose(out_infer, ref_infer, atol=1e-4, rtol=1e-4)

    print("KERNEL_OK")
</pallas_src>

<mosaic_0001>
module attributes {stable_mosaic.version = 11 : i64} {
  func.func @_arc_margin_train_kernel(%arg0: i32, %arg1: memref<8x1xi32, #tpu.memory_space<vmem>>, %arg2: memref<8x64xf32, #tpu.memory_space<vmem>>, %arg3: memref<128x64xf32, #tpu.memory_space<vmem>>, %arg4: memref<8x128xf32, #tpu.memory_space<vmem>>) attributes {dimension_semantics = [#tpu.dimension_semantics<parallel>], iteration_bounds = array<i64: 2>, scalar_prefetch = 0 : i64, scratch_operands = 0 : i64, tpu.core_type = #tpu.core_type<tc>, window_params = [{pipeline_mode = #tpu.pipeline_mode<synchronous>, transform_indices = @transform_0, window_bounds = array<i64: 8, 1>}, {pipeline_mode = #tpu.pipeline_mode<synchronous>, transform_indices = @transform_1, window_bounds = array<i64: 8, 64>}, {transform_indices = @transform_2, window_bounds = array<i64: 128, 64>}, {transform_indices = @transform_3, window_bounds = array<i64: 8, 128>}]} {
    %c0 = arith.constant 0 : index
    %c0_0 = arith.constant 0 : index
    %0 = vector.load %arg2[%c0, %c0_0] : memref<8x64xf32, #tpu.memory_space<vmem>>, vector<8x64xf32>
    %c0_1 = arith.constant 0 : index
    %c0_2 = arith.constant 0 : index
    %1 = vector.load %arg3[%c0_1, %c0_2] : memref<128x64xf32, #tpu.memory_space<vmem>>, vector<128x64xf32>
    %2 = arith.mulf %0, %0 : vector<8x64xf32>
    %cst = arith.constant dense<0.000000e+00> : vector<8xf32>
    %3 = vector.multi_reduction <add>, %2, %cst [1] : vector<8x64xf32> to vector<8xf32>
    %4 = vector.shape_cast %3 : vector<8xf32> to vector<8x1xf32>
    %cst_3 = arith.constant 1.000000e-24 : f32
    %5 = vector.broadcast %cst_3 : f32 to vector<8x1xf32>
    %6 = arith.maximumf %4, %5 : vector<8x1xf32>
    %7 = math.rsqrt %6 : vector<8x1xf32>
    %8 = vector.broadcast %7 : vector<8x1xf32> to vector<8x64xf32>
    %9 = arith.mulf %0, %8 : vector<8x64xf32>
    %10 = arith.mulf %1, %1 : vector<128x64xf32>
    %cst_4 = arith.constant dense<0.000000e+00> : vector<128xf32>
    %11 = vector.multi_reduction <add>, %10, %cst_4 [1] : vector<128x64xf32> to vector<128xf32>
    %12 = vector.shape_cast %11 : vector<128xf32> to vector<128x1xf32>
    %cst_5 = arith.constant 1.000000e-24 : f32
    %13 = vector.broadcast %cst_5 : f32 to vector<128x1xf32>
    %14 = arith.maximumf %12, %13 : vector<128x1xf32>
    %15 = math.rsqrt %14 : vector<128x1xf32>
    %16 = vector.broadcast %15 : vector<128x1xf32> to vector<128x64xf32>
    %17 = arith.mulf %1, %16 : vector<128x64xf32>
    %cst_6 = arith.constant dense<0.000000e+00> : vector<8x128xf32>
    %18 = tpu.matmul %9, %17, %cst_6 {dimension_numbers = #tpu.dot_dimension_numbers<[1], [1], [0], [0], [0, 0, 1, 0], [], []>, precision = #tpu.contract_precision<fp32>} : vector<8x64xf32>, vector<128x64xf32>, vector<8x128xf32> -> vector<8x128xf32>
    %c0_7 = arith.constant 0 : index
    %c0_8 = arith.constant 0 : index
    %19 = vector.load %arg1[%c0_7, %c0_8] : memref<8x1xi32, #tpu.memory_space<vmem>>, vector<8x1xi32>
    %c128_i32 = arith.constant 128 : i32
    %20 = arith.muli %arg0, %c128_i32 : i32
    %21 = tpu.iota {dimensions = array<i32: 1>} : vector<8x128xi32>
    %22 = vector.broadcast %20 : i32 to vector<8x128xi32>
    %23 = arith.addi %22, %21 : vector<8x128xi32>
    %24 = vector.broadcast %19 : vector<8x1xi32> to vector<8x128xi32>
    %25 = arith.cmpi eq, %23, %24 : vector<8x128xi32>
    %cst_9 = arith.constant 0.000000e+00 : f32
    %26 = vector.broadcast %cst_9 : f32 to vector<8x128xf32>
    %27 = arith.select %25, %18, %26 : vector<8x128xi1>, vector<8x128xf32>
    %cst_10 = arith.constant dense<0.000000e+00> : vector<8xf32>
    %28 = vector.multi_reduction <add>, %27, %cst_10 [1] : vector<8x128xf32> to vector<8xf32>
    %29 = vector.shape_cast %28 : vector<8xf32> to vector<8x1xf32>
    %30 = arith.mulf %29, %29 : vector<8x1xf32>
    %cst_11 = arith.constant 1.000000e+00 : f32
    %31 = vector.broadcast %cst_11 : f32 to vector<8x1xf32>
    %32 = arith.subf %31, %30 : vector<8x1xf32>
    %cst_12 = arith.constant 0.000000e+00 : f32
    %33 = vector.broadcast %cst_12 : f32 to vector<8x1xf32>
    %34 = arith.maximumf %32, %33 : vector<8x1xf32>
    %35 = math.sqrt %34 : vector<8x1xf32>
    %cst_13 = arith.constant 0.87758255 : f32
    %36 = vector.broadcast %cst_13 : f32 to vector<8x1xf32>
    %37 = arith.mulf %29, %36 : vector<8x1xf32>
    %cst_14 = arith.constant 0.47942555 : f32
    %38 = vector.broadcast %cst_14 : f32 to vector<8x1xf32>
    %39 = arith.mulf %35, %38 : vector<8x1xf32>
    %40 = arith.subf %37, %39 : vector<8x1xf32>
    %cst_15 = arith.constant -0.87758255 : f32
    %41 = vector.broadcast %cst_15 : f32 to vector<8x1xf32>
    %42 = arith.cmpf ogt, %29, %41 : vector<8x1xf32>
    %cst_16 = arith.constant 0.239712775 : f32
    %43 = vector.broadcast %cst_16 : f32 to vector<8x1xf32>
    %44 = arith.subf %29, %43 : vector<8x1xf32>
    %45 = arith.select %42, %40, %44 : vector<8x1xi1>, vector<8x1xf32>
    %46 = vector.shape_cast %45 : vector<8x1xf32> to vector<8x1xf32>
    %47 = vector.broadcast %46 : vector<8x1xf32> to vector<8x128xf32>
    %48 = arith.select %25, %47, %18 : vector<8x128xi1>, vector<8x128xf32>
    %cst_17 = arith.constant 3.000000e+01 : f32
    %49 = vector.broadcast %cst_17 : f32 to vector<8x128xf32>
    %50 = arith.mulf %48, %49 : vector<8x128xf32>
    %c0_18 = arith.constant 0 : index
    %c0_19 = arith.constant 0 : index
    %51 = vector.load %arg4[%c0_18, %c0_19] : memref<8x128xf32, #tpu.memory_space<vmem>>, vector<8x128xf32>
    tpu.vector_store %arg4[%c0_18, %c0_19], %50 {strides = array<i32>} : memref<8x128xf32, #tpu.memory_space<vmem>>, vector<8x128xf32>,
    return
  }
  func.func @transform_0(%arg0: i32) -> (i32, i32) {
    %c0_i32 = arith.constant 0 : i32
    %c0_i32_0 = arith.constant 0 : i32
    %c0_i32_1 = arith.constant 0 : i32
    return %c0_i32, %c0_i32_0 : i32, i32
  }
  func.func @transform_1(%arg0: i32) -> (i32, i32) {
    %c0_i32 = arith.constant 0 : i32
    %c0_i32_0 = arith.constant 0 : i32
    %c0_i32_1 = arith.constant 0 : i32
    return %c0_i32, %c0_i32_0 : i32, i32
  }
  func.func @transform_2(%arg0: i32) -> (i32, i32) {
    %c0_i32 = arith.constant 0 : i32
    %c0_i32_0 = arith.constant 0 : i32
    return %arg0, %c0_i32 : i32, i32
  }
  func.func @transform_3(%arg0: i32) -> (i32, i32) {
    %c0_i32 = arith.constant 0 : i32
    %c0_i32_0 = arith.constant 0 : i32
    return %c0_i32, %arg0 : i32, i32
  }
}

</mosaic_0001>

<llo_original>
// kernel: tpu_custom_call.1
$region0: #{tpu_custom_call.1}
  #allocation0 [shape = 'u32[]', space=smem, size = 0x4, offset = 0x4, fixed_abs, tag = 'smem constant byte address 0x4 - core index']
  #allocation1 [shape = 'u32[144,128]{1,0:T(1,128)}', space=vmem, size = 0x12000, scoped, tag = 'internal scratch']
  %s0 = inlined_call_operand.vmem [shape: s32[8,1], index: 0, kind: input, shape index: {}]
  %s1 = inlined_call_operand.vmem [shape: f32[8,64], index: 1, kind: input, shape index: {}]
  %s2 = inlined_call_operand.vmem [shape: f32[256,64], index: 2, kind: input, shape index: {}]
  %s3 = inlined_call_operand.hbm [shape: f32[8,256], index: 3, kind: output, shape index: {}]
  %s4 = sld [smem:[#allocation0]]
  $region45: #{tpu_custom_call.1} parent=0
    _
  %s6 = ssub.s32 1, %s4
  %s7 = scalar_select 0, %s6, %s4
  $region1: #{tpu_custom_call.1} parent=0
    #allocation2 [shape = 'u8[8192]{0}', space=vmem, size = 0x2000, scoped, tag = 'output window, operand 0']
    #allocation3 [shape = 's32[2]{0}', space=sflag, size = 0x8, scoped, tag = 'scoped memory for tpu_custom_call.1']
    %8 = vsyncpa [#allocation3], 0
    %s9 = scalar_lea.sflag [#allocation3], 1
    %10 = vsyncpa %s9, 0
    loop: start=0, step=1, limit=4
    $region2: #{tpu_custom_call.1} parent=1 // loop_pre_header
      _
    $region3: #{tpu_custom_call.1} parent=1 // loop_header
      %s12 = sphi 0, %s16
      %p13 = scmp.ge.s32.totalorder %s12, 4
      %s20 = sphi 0, %s20
      %s22 = sphi 0, %s20
      %s23 = sphi 0, %s22
      %s37 = sphi 0, %s23
      %s41 = sphi 0, %s41
      %s43 = sphi 0, %s41
      %s44 = sphi 0, %s43
      %s58 = sphi 0, %s44
      %s64 = sphi 0, %s66
      %s67 = sphi 0, %s64
      %s68 = sphi 0, %s67
      %s84 = sphi 0, %s68
      %s90 = sphi 0, %s92
      %s93 = sphi 0, %s90
      %s94 = sphi 0, %s93
      %s110 = sphi 0, %s94
    $region4: #{tpu_custom_call.1} parent=1 // loop_header_branch
      %15 = sbr.rel (%p13) target = $region8
    $region5: #{tpu_custom_call.1} parent=1 // loop_body
      %s17 = ssub.s32 %s12, 1
      %s18 = ssub.s32 %s12, 2
      %s19 = sadd.s32 %s12, 1
      %s21 = sadd.s32 %s20, 1
      %p24 = scmp.eq.s32.totalorder %s12, 1
      %p25 = scmp.ne.s32.totalorder %s20, %s22
      %p26 = scmp.eq.s32.totalorder %s12, 0
      %p27 = por %p25, %p26
      %p28 = scmp.ne.s32.totalorder %s20, %s22
      %p29 = scmp.eq.s32.totalorder %s17, 1
      %p30 = por %p28, %p29
      %p31 = scmp.ne.s32.totalorder %s22, %s23
      %p32 = scmp.eq.s32.totalorder %s17, 0
      %p33 = por %p31, %p32
      %p34 = scmp.ne.s32.totalorder %s22, %s23
      %p35 = scmp.eq.s32.totalorder %s18, 1
      %p36 = por %p34, %p35
      %p38 = scmp.ne.s32.totalorder %s23, %s37
      %p39 = scmp.eq.s32.totalorder %s18, 0
      %p40 = por %p38, %p39
      %s42 = sadd.s32 %s41, 1
      %p45 = scmp.eq.s32.totalorder %s12, 1
      %p46 = scmp.ne.s32.totalorder %s41, %s43
      %p47 = scmp.eq.s32.totalorder %s12, 0
      %p48 = por %p46, %p47
      %p49 = scmp.ne.s32.totalorder %s41, %s43
      %p50 = scmp.eq.s32.totalorder %s17, 1
      %p51 = por %p49, %p50
      %p52 = scmp.ne.s32.totalorder %s43, %s44
      %p53 = scmp.eq.s32.totalorder %s17, 0
      %p54 = por %p52, %p53
      %p55 = scmp.ne.s32.totalorder %s43, %s44
      %p56 = scmp.eq.s32.totalorder %s18, 1
      %p57 = por %p55, %p56
      %p59 = scmp.ne.s32.totalorder %s44, %s58
      %p60 = scmp.eq.s32.totalorder %s18, 0
      %p61 = por %p59, %p60
      %s62 = ssub.s32 %s12, %s19
      %p63 = scmp.eq.s32.totalorder %s62, 0
      %s65 = sadd.s32 %s64, 1
      %s66 = scalar_select %p63, %s64, %s65
      %p69 = pneg %p63
      %p70 = scmp.eq.s32.totalorder %s12, 1
      %p71 = por %p69, %p70
      %p72 = scmp.ne.s32.totalorder %s64, %s67
      %p73 = scmp.eq.s32.totalorder %s12, 0
      %p74 = por %p72, %p73
      %p75 = scmp.ne.s32.totalorder %s64, %s67
      %p76 = scmp.eq.s32.totalorder %s17, 1
      %p77 = por %p75, %p76
      %p78 = scmp.ne.s32.totalorder %s67, %s68
      %p79 = scmp.eq.s32.totalorder %s17, 0
      %p80 = por %p78, %p79
      %p81 = scmp.ne.s32.totalorder %s67, %s68
      %p82 = scmp.eq.s32.totalorder %s18, 1
      %p83 = por %p81, %p82
      %p85 = scmp.ne.s32.totalorder %s68, %s84
      %p86 = scmp.eq.s32.totalorder %s18, 0
      %p87 = por %p85, %p86
      %s88 = ssub.s32 %s12, %s19
      %p89 = scmp.eq.s32.totalorder %s88, 0
      %s91 = sadd.s32 %s90, 1
      %s92 = scalar_select %p89, %s90, %s91
      %p95 = pneg %p89
      %p96 = scmp.eq.s32.totalorder %s12, 1
      %p97 = por %p95, %p96
      %p98 = scmp.ne.s32.totalorder %s90, %s93
      %p99 = scmp.eq.s32.totalorder %s12, 0
      %p100 = por %p98, %p99
      %p101 = scmp.ne.s32.totalorder %s90, %s93
      %p102 = scmp.eq.s32.totalorder %s17, 1
      %p103 = por %p101, %p102
      %p104 = scmp.ne.s32.totalorder %s93, %s94
      %p105 = scmp.eq.s32.totalorder %s17, 0
      %p106 = por %p104, %p105
      %p107 = scmp.ne.s32.totalorder %s93, %s94
      %p108 = scmp.eq.s32.totalorder %s18, 1
      %p109 = por %p107, %p108
      %p111 = scmp.ne.s32.totalorder %s94, %s110
      %p112 = scmp.eq.s32.totalorder %s18, 0
      %p113 = por %p111, %p112
      %p114 = scmp.le.s32.totalorder 1, %s12
      %p115 = scmp.lt.s32.totalorder %s12, 3
      %p116 = pnand %p114, %p115
      %p117 = pneg %p116
      // Predicated region
      $region9: #{tpu_custom_call.1} parent=5 // pred_check
        _
      $region10: #{tpu_custom_call.1} parent=5 // pred_check_branch
        %119 = sbr.rel (%p116) target = $region12
      $region11: #{tpu_custom_call.1} parent=5 // pred_region
        %s120 = ssub.s32 %s12, 1
        // Predicated region
        $region13: #{tpu_custom_call.1} parent=11 // pred_check
          %p121 = pneg %p33
        $region14: #{tpu_custom_call.1} parent=11 // pred_check_branch
          %123 = sbr.rel (%p121) target = $region16
        $region15: #{tpu_custom_call.1} parent=11 // pred_region
          _
        $region16: #{tpu_custom_call.1} parent=11 // pred_fallthru
          _
        // Predicated region
        $region17: #{tpu_custom_call.1} parent=11 // pred_check
          %p124 = pneg %p54
        $region18: #{tpu_custom_call.1} parent=11 // pred_check_branch
          %126 = sbr.rel (%p124) target = $region20
        $region19: #{tpu_custom_call.1} parent=11 // pred_region
          _
        $region20: #{tpu_custom_call.1} parent=11 // pred_fallthru
          _
      $region12: #{tpu_custom_call.1} parent=5 // pred_fallthru
        _
      %p127 = scmp.lt.s32.totalorder %s12, 2
      // Predicated region
      $region21: #{tpu_custom_call.1} parent=5 // pred_check
        %p128 = pneg %p127
      $region22: #{tpu_custom_call.1} parent=5 // pred_check_branch
        %130 = sbr.rel (%p128) target = $region24
      $region23: #{tpu_custom_call.1} parent=5 // pred_region
        // Predicated region
        $region25: #{tpu_custom_call.1} parent=23 // pred_check
          %p131 = pneg %p74
        $region26: #{tpu_custom_call.1} parent=23 // pred_check_branch
          %133 = sbr.rel (%p131) target = $region28
        $region27: #{tpu_custom_call.1} parent=23 // pred_region
          %s134 = smul.u32 16, %s12
          %p135 = scmp.lt.s32.totalorder %s134, 31
          %s136 = scalar_select %p135, %s134, 31
          %s137 = smul.addr %s136, 8
          %s138 = scalar_lea.vmem %s2, %s137
          %s139 = smul.u32 16, %s12
        $region28: #{tpu_custom_call.1} parent=23 // pred_fallthru
          _
      $region24: #{tpu_custom_call.1} parent=5 // pred_fallthru
        _
      %p140 = scmp.le.s32.totalorder 1, %s12
      %p141 = scmp.lt.s32.totalorder %s12, 3
      %p142 = pnand %p140, %p141
      %p143 = pneg %p142
      // Predicated region
      $region29: #{tpu_custom_call.1} parent=5 // pred_check
        _
      $region30: #{tpu_custom_call.1} parent=5 // pred_check_branch
        %145 = sbr.rel (%p142) target = $region32
      $region31: #{tpu_custom_call.1} parent=5 // pred_region
        %s146 = ssub.s32 %s12, 1
        %p147 = pneg %p33
        %p148 = pneg %p30
        %p149 = pneg %p54
        %p150 = pneg %p51
        %s151 = smul.u32 16, %s17
        %p152 = scmp.lt.s32.totalorder %s151, 31
        %s153 = scalar_select %p152, %s151, 31
        %s154 = smul.addr %s153, 8
        %s155 = scalar_lea.vmem %s2, %s154
        %p156 = pneg %p80
        %p157 = pneg %p77
        %p158 = pneg %p106
        %p159 = pneg %p103
        %s160 = sand.u32 %s93, 1
        %s161 = scalar_lea.sflag [#allocation3], %s160
        %s162 = sand.u32 %s93, 1
        %s163 = smul.addr %s162, 8
        %s164 = scalar_lea.vmem [#allocation2], %s163
        %s165 = smul.u32 16, %s17
        %p166 = scmp.lt.s32.totalorder %s165, 31
        %s167 = scalar_select %p166, %s165, 31
        %s168 = smul.addr %s167, 8
        %s169 = scalar_lea.vmem %s2, %s168
        %s170 = smul.u32 16, %s17
        %v171 = vld [vmem:[%s1] sm:$0xff]
        %v172 = vld [vmem:[%s169] sm:$0xff]
        %v173 = vld [vmem:[%s169 + $0x8] sm:$0xff]
        %v174 = vld [vmem:[%s169 + $0x10] sm:$0xff]
        %v175 = vld [vmem:[%s169 + $0x18] sm:$0xff]
        %v176 = vld [vmem:[%s169 + $0x20] sm:$0xff]
        %v177 = vld [vmem:[%s169 + $0x28] sm:$0xff]
        %v178 = vld [vmem:[%s169 + $0x30] sm:$0xff]
        %v179 = vld [vmem:[%s169 + $0x38] sm:$0xff]
        %v180 = vld [vmem:[%s169 + $0x40] sm:$0xff]
        %v181 = vld [vmem:[%s169 + $0x48] sm:$0xff]
        %v182 = vld [vmem:[%s169 + $0x50] sm:$0xff]
        %v183 = vld [vmem:[%s169 + $0x58] sm:$0xff]
        %v184 = vld [vmem:[%s169 + $0x60] sm:$0xff]
        %v185 = vld [vmem:[%s169 + $0x68] sm:$0xff]
        %v186 = vld [vmem:[%s169 + $0x70] sm:$0xff]
        %v187 = vld [vmem:[%s169 + $0x78] sm:$0xff]
        %v188 = vmul.f32 %v171, %v171
        %vm189 = vcmask 523264
        %v190 = vsel %vm189, %v188, 0.0
        %191 = vadd.xlane.f32.xlu0 %v190
        %v192 = vpop.xlane.xlu0 %191
        %v193 = vmax.f32 %v192, 1e-24
        %v194 = vrsqrt.pop %v193
        %v195 = vmul.f32 %v171, %v194
        %v196 = vmul.f32 %v172, %v172
        %v197 = vmul.f32 %v173, %v173
        %v198 = vmul.f32 %v174, %v174
        %v199 = vmul.f32 %v175, %v175
        %v200 = vmul.f32 %v176, %v176
        %v201 = vmul.f32 %v177, %v177
        %v202 = vmul.f32 %v178, %v178
        %v203 = vmul.f32 %v179, %v179
        %v204 = vmul.f32 %v180, %v180
        %v205 = vmul.f32 %v181, %v181
        %v206 = vmul.f32 %v182, %v182
        %v207 = vmul.f32 %v183, %v183
        %v208 = vmul.f32 %v184, %v184
        %v209 = vmul.f32 %v185, %v185
        %v210 = vmul.f32 %v186, %v186
        %v211 = vmul.f32 %v187, %v187
        %v212 = vsel %vm189, %v196, 0.0
        %213 = vadd.xlane.f32.xlu0 %v212
        %v214 = vpop.xlane.xlu0 %213
        %v215 = vsel %vm189, %v197, 0.0
        %216 = vadd.xlane.f32.xlu0 %v215
        %v217 = vpop.xlane.xlu0 %216
        %v218 = vsel %vm189, %v198, 0.0
        %219 = vadd.xlane.f32.xlu0 %v218
        %v220 = vpop.xlane.xlu0 %219
        %v221 = vsel %vm189, %v199, 0.0
        %222 = vadd.xlane.f32.xlu0 %v221
        %v223 = vpop.xlane.xlu0 %222
        %v224 = vsel %vm189, %v200, 0.0
        %225 = vadd.xlane.f32.xlu0 %v224
        %v226 = vpop.xlane.xlu0 %225
        %v227 = vsel %vm189, %v201, 0.0
        %228 = vadd.xlane.f32.xlu0 %v227
        %v229 = vpop.xlane.xlu0 %228
        %v230 = vsel %vm189, %v202, 0.0
        %231 = vadd.xlane.f32.xlu0 %v230
        %v232 = vpop.xlane.xlu0 %231
        %v233 = vsel %vm189, %v203, 0.0
        %234 = vadd.xlane.f32.xlu0 %v233
        %v235 = vpop.xlane.xlu0 %234
        %v236 = vsel %vm189, %v204, 0.0
        %237 = vadd.xlane.f32.xlu0 %v236
        %v238 = vpop.xlane.xlu0 %237
        %v239 = vsel %vm189, %v205, 0.0
        %240 = vadd.xlane.f32.xlu0 %v239
        %v241 = vpop.xlane.xlu0 %240
        %v242 = vsel %vm189, %v206, 0.0
        %243 = vadd.xlane.f32.xlu0 %v242
        %v244 = vpop.xlane.xlu0 %243
        %v245 = vsel %vm189, %v207, 0.0
        %246 = vadd.xlane.f32.xlu0 %v245
        %v247 = vpop.xlane.xlu0 %246
        %v248 = vsel %vm189, %v208, 0.0
        %249 = vadd.xlane.f32.xlu0 %v248
        %v250 = vpop.xlane.xlu0 %249
        %v251 = vsel %vm189, %v209, 0.0
        %252 = vadd.xlane.f32.xlu0 %v251
        %v253 = vpop.xlane.xlu0 %252
        %v254 = vsel %vm189, %v210, 0.0
        %255 = vadd.xlane.f32.xlu0 %v254
        %v256 = vpop.xlane.xlu0 %255
        %v257 = vsel %vm189, %v211, 0.0
        %258 = vadd.xlane.f32.xlu0 %v257
        %v259 = vpop.xlane.xlu0 %258
        %v260 = vmax.f32 %v214, 1e-24
        %v261 = vmax.f32 %v217, 1e-24
        %v262 = vmax.f32 %v220, 1e-24
        %v263 = vmax.f32 %v223, 1e-24
        %v264 = vmax.f32 %v226, 1e-24
        %v265 = vmax.f32 %v229, 1e-24
        %v266 = vmax.f32 %v232, 1e-24
        %v267 = vmax.f32 %v235, 1e-24
        %v268 = vmax.f32 %v238, 1e-24
        %v269 = vmax.f32 %v241, 1e-24
        %v270 = vmax.f32 %v244, 1e-24
        %v271 = vmax.f32 %v247, 1e-24
        %v272 = vmax.f32 %v250, 1e-24
        %v273 = vmax.f32 %v253, 1e-24
        %v274 = vmax.f32 %v256, 1e-24
        %v275 = vmax.f32 %v259, 1e-24
        %v276 = vrsqrt.pop %v260
        %v277 = vrsqrt.pop %v261
        %v278 = vrsqrt.pop %v262
        %v279 = vrsqrt.pop %v263
        %v280 = vrsqrt.pop %v264
        %v281 = vrsqrt.pop %v265
        %v282 = vrsqrt.pop %v266
        %v283 = vrsqrt.pop %v267
        %v284 = vrsqrt.pop %v268
        %v285 = vrsqrt.pop %v269
        %v286 = vrsqrt.pop %v270
        %v287 = vrsqrt.pop %v271
        %v288 = vrsqrt.pop %v272
        %v289 = vrsqrt.pop %v273
        %v290 = vrsqrt.pop %v274
        %v291 = vrsqrt.pop %v275
        %v292 = vmul.f32 %v172, %v276
        %v293 = vmul.f32 %v173, %v277
        %v294 = vmul.f32 %v174, %v278
        %v295 = vmul.f32 %v175, %v279
        %v296 = vmul.f32 %v176, %v280
        %v297 = vmul.f32 %v177, %v281
        %v298 = vmul.f32 %v178, %v282
        %v299 = vmul.f32 %v179, %v283
        %v300 = vmul.f32 %v180, %v284
        %v301 = vmul.f32 %v181, %v285
        %v302 = vmul.f32 %v182, %v286
        %v303 = vmul.f32 %v183, %v287
        %v304 = vmul.f32 %v184, %v288
        %v305 = vmul.f32 %v185, %v289
        %v306 = vmul.f32 %v186, %v290
        %v307 = vmul.f32 %v187, %v291
        %v309 = vsel %vm189, %v195, 0
        %v312 = vsel %vm189, %v292, 0
        %v315 = vsel %vm189, %v293, 0
        %v318 = vsel %vm189, %v294, 0
        %v321 = vsel %vm189, %v295, 0
        %v324 = vsel %vm189, %v296, 0
        %v327 = vsel %vm189, %v297, 0
        %v330 = vsel %vm189, %v298, 0
        %v333 = vsel %vm189, %v299, 0
        %v336 = vsel %vm189, %v300, 0
        %v339 = vsel %vm189, %v301, 0
        %v342 = vsel %vm189, %v302, 0
        %v345 = vsel %vm189, %v303, 0
        %v348 = vsel %vm189, %v304, 0
        %v351 = vsel %vm189, %v305, 0
        %v354 = vsel %vm189, %v306, 0
        %v357 = vsel %vm189, %v307, 0
        %359 = vmatprep.subr.mxu0 0.0
        %v360 = vand.u32 %v357, 4294901760
        %361 = vmatpush1.xpose.msra.mxu0 %v360
        %362 = vmatprep.subr.mxu0 0.0
        %v363 = vand.u32 %v354, 4294901760
        %364 = vmatpush1.xpose.msra.mxu0 %v363
        %365 = vmatprep.subr.mxu0 0.0
        %v366 = vand.u32 %v351, 4294901760
        %367 = vmatpush1.xpose.msra.mxu0 %v366
        %368 = vmatprep.subr.mxu0 0.0
        %v369 = vand.u32 %v348, 4294901760
        %370 = vmatpush1.xpose.msra.mxu0 %v369
        %371 = vmatprep.subr.mxu0 0.0
        %v372 = vand.u32 %v345, 4294901760
        %373 = vmatpush1.xpose.msra.mxu0 %v372
        %374 = vmatprep.subr.mxu0 0.0
        %v375 = vand.u32 %v342, 4294901760
        %376 = vmatpush1.xpose.msra.mxu0 %v375
        %377 = vmatprep.subr.mxu0 0.0
        %v378 = vand.u32 %v339, 4294901760
        %379 = vmatpush1.xpose.msra.mxu0 %v378
        %380 = vmatprep.subr.mxu0 0.0
        %v381 = vand.u32 %v336, 4294901760
        %382 = vmatpush1.xpose.msra.mxu0 %v381
        %383 = vmatprep.subr.mxu0 0.0
        %v384 = vand.u32 %v333, 4294901760
        %385 = vmatpush1.xpose.msra.mxu0 %v384
        %386 = vmatprep.subr.mxu0 0.0
        %v387 = vand.u32 %v330, 4294901760
        %388 = vmatpush1.xpose.msra.mxu0 %v387
        %389 = vmatprep.subr.mxu0 0.0
        %v390 = vand.u32 %v327, 4294901760
        %391 = vmatpush1.xpose.msra.mxu0 %v390
        %392 = vmatprep.subr.mxu0 0.0
        %v393 = vand.u32 %v324, 4294901760
        %394 = vmatpush1.xpose.msra.mxu0 %v393
        %395 = vmatprep.subr.mxu0 0.0
        %v396 = vand.u32 %v321, 4294901760
        %397 = vmatpush1.xpose.msra.mxu0 %v396
        %398 = vmatprep.subr.mxu0 0.0
        %v399 = vand.u32 %v318, 4294901760
        %400 = vmatpush1.xpose.msra.mxu0 %v399
        %401 = vmatprep.subr.mxu0 0.0
        %v402 = vand.u32 %v315, 4294901760
        %403 = vmatpush1.xpose.msra.mxu0 %v402
        %404 = vmatprep.subr.mxu0 0.0
        %v405 = vand.u32 %v312, 4294901760
        %406 = vmatpush1.xpose.msra.mxu0 %v405
        %407 = vmatprep.subr.mxu0 0.0
        %408 = vmatpush2.xpose.msra.mxu0 0.0
        %409 = vmatprep.subr.mxu0 0.0
        %410 = vmatpush2.xpose.msra.mxu0 0.0
        %411 = vmatprep.subr.mxu0 0.0
        %412 = vmatpush2.xpose.msra.mxu0 0.0
        %413 = vmatprep.subr.mxu0 0.0
        %414 = vmatpush2.xpose.msra.mxu0 0.0
        %415 = vmatprep.subr.mxu0 0.0
        %416 = vmatpush2.xpose.msra.mxu0 0.0
        %417 = vmatprep.subr.mxu0 0.0
        %418 = vmatpush2.xpose.msra.mxu0 0.0
        %419 = vmatprep.subr.mxu0 0.0
        %420 = vmatpush2.xpose.msra.mxu0 0.0
        %421 = vmatprep.subr.mxu0 0.0
        %422 = vmatpush2.xpose.msra.mxu0 0.0
        %423 = vmatprep.subr.mxu0 0.0
        %424 = vmatpush2.xpose.msra.mxu0 0.0
        %425 = vmatprep.subr.mxu0 0.0
        %426 = vmatpush2.xpose.msra.mxu0 0.0
        %427 = vmatprep.subr.mxu0 0.0
        %428 = vmatpush2.xpose.msra.mxu0 0.0
        %429 = vmatprep.subr.mxu0 0.0
        %430 = vmatpush2.xpose.msra.mxu0 0.0
        %431 = vmatprep.subr.mxu0 0.0
        %432 = vmatpush2.xpose.msra.mxu0 0.0
        %433 = vmatprep.subr.mxu0 0.0
        %434 = vmatpush2.xpose.msra.mxu0 0.0
        %435 = vmatprep.subr.mxu0 0.0
        %436 = vmatpush2.xpose.msra.mxu0 0.0
        %437 = vmatprep.subr.mxu0 0.0
        %438 = vmatpush2.xpose.msra.mxu0 0.0
        %439 = vmatprep.mubr.f32.mxu0 0.0
        %v440 = vand.u32 %v309, 4294901760
        %v441 = vsub.f32 %v309, %v440
        %v442 = vand.u32 %v441, 4294901760
        %v443 = vsub.f32 %v441, %v442
        %v444 = vand.u32 %v443, 4294901760
        %445 = vmatmul.mubr.f32.gmra.mxu0 %v444
        %v446 = vpop.f32.mrf.mxu0
        %v447 = vadd.f32 0.0, %v446
        %v448 = vpop.f32.mrf.mxu0
        %449 = vdwg.mxu0
        %450 = vmatprep.subr.mxu0 0.0
        %v451 = vand.u32 %v357, 4294901760
        %v452 = vsub.f32 %v357, %v451
        %v453 = vand.u32 %v452, 4294901760
        %v454 = vsub.f32 %v452, %v453
        %v455 = vand.u32 %v454, 4294901760
        %456 = vmatpush1.xpose.msra.mxu0 %v455
        %457 = vmatprep.subr.mxu0 0.0
        %v458 = vand.u32 %v354, 4294901760
        %v459 = vsub.f32 %v354, %v458
        %v460 = vand.u32 %v459, 4294901760
        %v461 = vsub.f32 %v459, %v460
        %v462 = vand.u32 %v461, 4294901760
        %463 = vmatpush1.xpose.msra.mxu0 %v462
        %464 = vmatprep.subr.mxu0 0.0
        %v465 = vand.u32 %v351, 4294901760
        %v466 = vsub.f32 %v351, %v465
        %v467 = vand.u32 %v466, 4294901760
        %v468 = vsub.f32 %v466, %v467
        %v469 = vand.u32 %v468, 4294901760
        %470 = vmatpush1.xpose.msra.mxu0 %v469
        %471 = vmatprep.subr.mxu0 0.0
        %v472 = vand.u32 %v348, 4294901760
        %v473 = vsub.f32 %v348, %v472
        %v474 = vand.u32 %v473, 4294901760
        %v475 = vsub.f32 %v473, %v474
        %v476 = vand.u32 %v475, 4294901760
        %477 = vmatpush1.xpose.msra.mxu0 %v476
        %478 = vmatprep.subr.mxu0 0.0
        %v479 = vand.u32 %v345, 4294901760
        %v480 = vsub.f32 %v345, %v479
        %v481 = vand.u32 %v480, 4294901760
        %v482 = vsub.f32 %v480, %v481
        %v483 = vand.u32 %v482, 4294901760
        %484 = vmatpush1.xpose.msra.mxu0 %v483
        %485 = vmatprep.subr.mxu0 0.0
        %v486 = vand.u32 %v342, 4294901760
        %v487 = vsub.f32 %v342, %v486
        %v488 = vand.u32 %v487, 4294901760
        %v489 = vsub.f32 %v487, %v488
        %v490 = vand.u32 %v489, 4294901760
        %491 = vmatpush1.xpose.msra.mxu0 %v490
        %492 = vmatprep.subr.mxu0 0.0
        %v493 = vand.u32 %v339, 4294901760
        %v494 = vsub.f32 %v339, %v493
        %v495 = vand.u32 %v494, 4294901760
        %v496 = vsub.f32 %v494, %v495
        %v497 = vand.u32 %v496, 4294901760
        %498 = vmatpush1.xpose.msra.mxu0 %v497
        %499 = vmatprep.subr.mxu0 0.0
        %v500 = vand.u32 %v336, 4294901760
        %v501 = vsub.f32 %v336, %v500
        %v502 = vand.u32 %v501, 4294901760
        %v503 = vsub.f32 %v501, %v502
        %v504 = vand.u32 %v503, 4294901760
        %505 = vmatpush1.xpose.msra.mxu0 %v504
        %506 = vmatprep.subr.mxu0 0.0
        %v507 = vand.u32 %v333, 4294901760
        %v508 = vsub.f32 %v333, %v507
        %v509 = vand.u32 %v508, 4294901760
        %v510 = vsub.f32 %v508, %v509
        %v511 = vand.u32 %v510, 4294901760
        %512 = vmatpush1.xpose.msra.mxu0 %v511
        %513 = vmatprep.subr.mxu0 0.0
        %v514 = vand.u32 %v330, 4294901760
        %v515 = vsub.f32 %v330, %v514
        %v516 = vand.u32 %v515, 4294901760
        %v517 = vsub.f32 %v515, %v516
        %v518 = vand.u32 %v517, 4294901760
        %519 = vmatpush1.xpose.msra.mxu0 %v518
        %520 = vmatprep.subr.mxu0 0.0
        %v521 = vand.u32 %v327, 4294901760
        %v522 = vsub.f32 %v327, %v521
        %v523 = vand.u32 %v522, 4294901760
        %v524 = vsub.f32 %v522, %v523
        %v525 = vand.u32 %v524, 4294901760
        %526 = vmatpush1.xpose.msra.mxu0 %v525
        %527 = vmatprep.subr.mxu0 0.0
        %v528 = vand.u32 %v324, 4294901760
        %v529 = vsub.f32 %v324, %v528
        %v530 = vand.u32 %v529, 4294901760
        %v531 = vsub.f32 %v529, %v530
        %v532 = vand.u32 %v531, 4294901760
        %533 = vmatpush1.xpose.msra.mxu0 %v532
        %534 = vmatprep.subr.mxu0 0.0
        %v535 = vand.u32 %v321, 4294901760
        %v536 = vsub.f32 %v321, %v535
        %v537 = vand.u32 %v536, 4294901760
        %v538 = vsub.f32 %v536, %v537
        %v539 = vand.u32 %v538, 4294901760
        %540 = vmatpush1.xpose.msra.mxu0 %v539
        %541 = vmatprep.subr.mxu0 0.0
        %v542 = vand.u32 %v318, 4294901760
        %v543 = vsub.f32 %v318, %v542
        %v544 = vand.u32 %v543, 4294901760
        %v545 = vsub.f32 %v543, %v544
        %v546 = vand.u32 %v545, 4294901760
        %547 = vmatpush1.xpose.msra.mxu0 %v546
        %548 = vmatprep.subr.mxu0 0.0
        %v549 = vand.u32 %v315, 4294901760
        %v550 = vsub.f32 %v315, %v549
        %v551 = vand.u32 %v550, 4294901760
        %v552 = vsub.f32 %v550, %v551
        %v553 = vand.u32 %v552, 4294901760
        %554 = vmatpush1.xpose.msra.mxu0 %v553
        %555 = vmatprep.subr.mxu0 0.0
        %v556 = vand.u32 %v312, 4294901760
        %v557 = vsub.f32 %v312, %v556
        %v558 = vand.u32 %v557, 4294901760
        %v559 = vsub.f32 %v557, %v558
        %v560 = vand.u32 %v559, 4294901760
        %561 = vmatpush1.xpose.msra.mxu0 %v560
        %562 = vmatprep.subr.mxu0 0.0
        %563 = vmatpush2.xpose.msra.mxu0 0.0
        %564 = vmatprep.subr.mxu0 0.0
        %565 = vmatpush2.xpose.msra.mxu0 0.0
        %566 = vmatprep.subr.mxu0 0.0
        %567 = vmatpush2.xpose.msra.mxu0 0.0
        %568 = vmatprep.subr.mxu0 0.0
        %569 = vmatpush2.xpose.msra.mxu0 0.0
        %570 = vmatprep.subr.mxu0 0.0
        %571 = vmatpush2.xpose.msra.mxu0 0.0
        %572 = vmatprep.subr.mxu0 0.0
        %573 = vmatpush2.xpose.msra.mxu0 0.0
        %574 = vmatprep.subr.mxu0 0.0
        %575 = vmatpush2.xpose.msra.mxu0 0.0
        %576 = vmatprep.subr.mxu0 0.0
        %577 = vmatpush2.xpose.msra.mxu0 0.0
        %578 = vmatprep.subr.mxu0 0.0
        %579 = vmatpush2.xpose.msra.mxu0 0.0
        %580 = vmatprep.subr.mxu0 0.0
        %581 = vmatpush2.xpose.msra.mxu0 0.0
        %582 = vmatprep.subr.mxu0 0.0
        %583 = vmatpush2.xpose.msra.mxu0 0.0
        %584 = vmatprep.subr.mxu0 0.0
        %585 = vmatpush2.xpose.msra.mxu0 0.0
        %586 = vmatprep.subr.mxu0 0.0
        %587 = vmatpush2.xpose.msra.mxu0 0.0
        %588 = vmatprep.subr.mxu0 0.0
        %589 = vmatpush2.xpose.msra.mxu0 0.0
        %590 = vmatprep.subr.mxu0 0.0
        %591 = vmatpush2.xpose.msra.mxu0 0.0
        %592 = vmatprep.subr.mxu0 0.0
        %593 = vmatpush2.xpose.msra.mxu0 0.0
        %594 = vmatprep.mubr.f32.mxu0 0.0
        %v595 = vand.u32 %v309, 4294901760
        %596 = vmatmul.mubr.f32.gmra.mxu0 %v595
        %v597 = vpop.f32.mrf.mxu0
        %v598 = vadd.f32 %v447, %v597
        %v599 = vpop.f32.mrf.mxu0
        %600 = vdwg.mxu0
        %601 = vmatprep.subr.mxu0 0.0
        %v602 = vand.u32 %v357, 4294901760
        %v603 = vsub.f32 %v357, %v602
        %604 = vmatpush1.xpose.msra.mxu0 %v603
        %605 = vmatprep.subr.mxu0 0.0
        %v606 = vand.u32 %v354, 4294901760
        %v607 = vsub.f32 %v354, %v606
        %608 = vmatpush1.xpose.msra.mxu0 %v607
        %609 = vmatprep.subr.mxu0 0.0
        %v610 = vand.u32 %v351, 4294901760
        %v611 = vsub.f32 %v351, %v610
        %612 = vmatpush1.xpose.msra.mxu0 %v611
        %613 = vmatprep.subr.mxu0 0.0
        %v614 = vand.u32 %v348, 4294901760
        %v615 = vsub.f32 %v348, %v614
        %616 = vmatpush1.xpose.msra.mxu0 %v615
        %617 = vmatprep.subr.mxu0 0.0
        %v618 = vand.u32 %v345, 4294901760
        %v619 = vsub.f32 %v345, %v618
        %620 = vmatpush1.xpose.msra.mxu0 %v619
        %621 = vmatprep.subr.mxu0 0.0
        %v622 = vand.u32 %v342, 4294901760
        %v623 = vsub.f32 %v342, %v622
        %624 = vmatpush1.xpose.msra.mxu0 %v623
        %625 = vmatprep.subr.mxu0 0.0
        %v626 = vand.u32 %v339, 4294901760
        %v627 = vsub.f32 %v339, %v626
        %628 = vmatpush1.xpose.msra.mxu0 %v627
        %629 = vmatprep.subr.mxu0 0.0
        %v630 = vand.u32 %v336, 4294901760
        %v631 = vsub.f32 %v336, %v630
        %632 = vmatpush1.xpose.msra.mxu0 %v631
        %633 = vmatprep.subr.mxu0 0.0
        %v634 = vand.u32 %v333, 4294901760
        %v635 = vsub.f32 %v333, %v634
        %636 = vmatpush1.xpose.msra.mxu0 %v635
        %637 = vmatprep.subr.mxu0 0.0
        %v638 = vand.u32 %v330, 4294901760
        %v639 = vsub.f32 %v330, %v638
        %640 = vmatpush1.xpose.msra.mxu0 %v639
        %641 = vmatprep.subr.mxu0 0.0
        %v642 = vand.u32 %v327, 4294901760
        %v643 = vsub.f32 %v327, %v642
        %644 = vmatpush1.xpose.msra.mxu0 %v643
        %645 = vmatprep.subr.mxu0 0.0
        %v646 = vand.u32 %v324, 4294901760
        %v647 = vsub.f32 %v324, %v646
        %648 = vmatpush1.xpose.msra.mxu0 %v647
        %649 = vmatprep.subr.mxu0 0.0
        %v650 = vand.u32 %v321, 4294901760
        %v651 = vsub.f32 %v321, %v650
        %652 = vmatpush1.xpose.msra.mxu0 %v651
        %653 = vmatprep.subr.mxu0 0.0
        %v654 = vand.u32 %v318, 4294901760
        %v655 = vsub.f32 %v318, %v654
        %656 = vmatpush1.xpose.msra.mxu0 %v655
        %657 = vmatprep.subr.mxu0 0.0
        %v658 = vand.u32 %v315, 4294901760
        %v659 = vsub.f32 %v315, %v658
        %660 = vmatpush1.xpose.msra.mxu0 %v659
        %661 = vmatprep.subr.mxu0 0.0
        %v662 = vand.u32 %v312, 4294901760
        %v663 = vsub.f32 %v312, %v662
        %664 = vmatpush1.xpose.msra.mxu0 %v663
        %665 = vmatprep.subr.mxu0 0.0
        %666 = vmatpush2.xpose.msra.mxu0 0.0
        %667 = vmatprep.subr.mxu0 0.0
        %668 = vmatpush2.xpose.msra.mxu0 0.0
        %669 = vmatprep.subr.mxu0 0.0
        %670 = vmatpush2.xpose.msra.mxu0 0.0
        %671 = vmatprep.subr.mxu0 0.0
        %672 = vmatpush2.xpose.msra.mxu0 0.0
        %673 = vmatprep.subr.mxu0 0.0
        %674 = vmatpush2.xpose.msra.mxu0 0.0
        %675 = vmatprep.subr.mxu0 0.0
        %676 = vmatpush2.xpose.msra.mxu0 0.0
        %677 = vmatprep.subr.mxu0 0.0
        %678 = vmatpush2.xpose.msra.mxu0 0.0
        %679 = vmatprep.subr.mxu0 0.0
        %680 = vmatpush2.xpose.msra.mxu0 0.0
        %681 = vmatprep.subr.mxu0 0.0
        %682 = vmatpush2.xpose.msra.mxu0 0.0
        %683 = vmatprep.subr.mxu0 0.0
        %684 = vmatpush2.xpose.msra.mxu0 0.0
        %685 = vmatprep.subr.mxu0 0.0
        %686 = vmatpush2.xpose.msra.mxu0 0.0
        %687 = vmatprep.subr.mxu0 0.0
        %688 = vmatpush2.xpose.msra.mxu0 0.0
        %689 = vmatprep.subr.mxu0 0.0
        %690 = vmatpush2.xpose.msra.mxu0 0.0
        %691 = vmatprep.subr.mxu0 0.0
        %692 = vmatpush2.xpose.msra.mxu0 0.0
        %693 = vmatprep.subr.mxu0 0.0
        %694 = vmatpush2.xpose.msra.mxu0 0.0
        %695 = vmatprep.subr.mxu0 0.0
        %696 = vmatpush2.xpose.msra.mxu0 0.0
        %697 = vmatprep.mubr.f32.mxu0 0.0
        %v698 = vand.u32 %v309, 4294901760
        %v699 = vsub.f32 %v309, %v698
        %700 = vmatmul.mubr.f32.gmra.mxu0 %v699
        %v701 = vpop.f32.mrf.mxu0
        %v702 = vadd.f32 %v598, %v701
        %v703 = vpop.f32.mrf.mxu0
        %704 = vdwg.mxu0
        %705 = vmatprep.subr.mxu0 0.0
        %v706 = vand.u32 %v357, 4294901760
        %707 = vmatpush1.xpose.msra.mxu0 %v706
        %708 = vmatprep.subr.mxu0 0.0
        %v709 = vand.u32 %v354, 4294901760
        %710 = vmatpush1.xpose.msra.mxu0 %v709
        %711 = vmatprep.subr.mxu0 0.0
        %v712 = vand.u32 %v351, 4294901760
        %713 = vmatpush1.xpose.msra.mxu0 %v712
        %714 = vmatprep.subr.mxu0 0.0
        %v715 = vand.u32 %v348, 4294901760
        %716 = vmatpush1.xpose.msra.mxu0 %v715
        %717 = vmatprep.subr.mxu0 0.0
        %v718 = vand.u32 %v345, 4294901760
        %719 = vmatpush1.xpose.msra.mxu0 %v718
        %720 = vmatprep.subr.mxu0 0.0
        %v721 = vand.u32 %v342, 4294901760
        %722 = vmatpush1.xpose.msra.mxu0 %v721
        %723 = vmatprep.subr.mxu0 0.0
        %v724 = vand.u32 %v339, 4294901760
        %725 = vmatpush1.xpose.msra.mxu0 %v724
        %726 = vmatprep.subr.mxu0 0.0
        %v727 = vand.u32 %v336, 4294901760
        %728 = vmatpush1.xpose.msra.mxu0 %v727
        %729 = vmatprep.subr.mxu0 0.0
        %v730 = vand.u32 %v333, 4294901760
        %731 = vmatpush1.xpose.msra.mxu0 %v730
        %732 = vmatprep.subr.mxu0 0.0
        %v733 = vand.u32 %v330, 4294901760
        %734 = vmatpush1.xpose.msra.mxu0 %v733
        %735 = vmatprep.subr.mxu0 0.0
        %v736 = vand.u32 %v327, 4294901760
        %737 = vmatpush1.xpose.msra.mxu0 %v736
        %738 = vmatprep.subr.mxu0 0.0
        %v739 = vand.u32 %v324, 4294901760
        %740 = vmatpush1.xpose.msra.mxu0 %v739
        %741 = vmatprep.subr.mxu0 0.0
        %v742 = vand.u32 %v321, 4294901760
        %743 = vmatpush1.xpose.msra.mxu0 %v742
        %744 = vmatprep.subr.mxu0 0.0
        %v745 = vand.u32 %v318, 4294901760
        %746 = vmatpush1.xpose.msra.mxu0 %v745
        %747 = vmatprep.subr.mxu0 0.0
        %v748 = vand.u32 %v315, 4294901760
        %749 = vmatpush1.xpose.msra.mxu0 %v748
        %750 = vmatprep.subr.mxu0 0.0
        %v751 = vand.u32 %v312, 4294901760
        %752 = vmatpush1.xpose.msra.mxu0 %v751
        %753 = vmatprep.subr.mxu0 0.0
        %754 = vmatpush2.xpose.msra.mxu0 0.0
        %755 = vmatprep.subr.mxu0 0.0
        %756 = vmatpush2.xpose.msra.mxu0 0.0
        %757 = vmatprep.subr.mxu0 0.0
        %758 = vmatpush2.xpose.msra.mxu0 0.0
        %759 = vmatprep.subr.mxu0 0.0
        %760 = vmatpush2.xpose.msra.mxu0 0.0
        %761 = vmatprep.subr.mxu0 0.0
        %762 = vmatpush2.xpose.msra.mxu0 0.0
        %763 = vmatprep.subr.mxu0 0.0
        %764 = vmatpush2.xpose.msra.mxu0 0.0
        %765 = vmatprep.subr.mxu0 0.0
        %766 = vmatpush2.xpose.msra.mxu0 0.0
        %767 = vmatprep.subr.mxu0 0.0
        %768 = vmatpush2.xpose.msra.mxu0 0.0
        %769 = vmatprep.subr.mxu0 0.0
        %770 = vmatpush2.xpose.msra.mxu0 0.0
        %771 = vmatprep.subr.mxu0 0.0
        %772 = vmatpush2.xpose.msra.mxu0 0.0
        %773 = vmatprep.subr.mxu0 0.0
        %774 = vmatpush2.xpose.msra.mxu0 0.0
        %775 = vmatprep.subr.mxu0 0.0
        %776 = vmatpush2.xpose.msra.mxu0 0.0
        %777 = vmatprep.subr.mxu0 0.0
        %778 = vmatpush2.xpose.msra.mxu0 0.0
        %779 = vmatprep.subr.mxu0 0.0
        %780 = vmatpush2.xpose.msra.mxu0 0.0
        %781 = vmatprep.subr.mxu0 0.0
        %782 = vmatpush2.xpose.msra.mxu0 0.0
        %783 = vmatprep.subr.mxu0 0.0
        %784 = vmatpush2.xpose.msra.mxu0 0.0
        %785 = vmatprep.mubr.f32.mxu0 0.0
        %v786 = vand.u32 %v309, 4294901760
        %v787 = vsub.f32 %v309, %v786
        %v788 = vand.u32 %v787, 4294901760
        %789 = vmatmul.mubr.f32.gmra.mxu0 %v788
        %v790 = vpop.f32.mrf.mxu0
        %v791 = vadd.f32 %v702, %v790
        %v792 = vpop.f32.mrf.mxu0
        %793 = vdwg.mxu0
        %794 = vmatprep.subr.mxu0 0.0
        %v795 = vand.u32 %v357, 4294901760
        %v796 = vsub.f32 %v357, %v795
        %v797 = vand.u32 %v796, 4294901760
        %798 = vmatpush1.xpose.msra.mxu0 %v797
        %799 = vmatprep.subr.mxu0 0.0
        %v800 = vand.u32 %v354, 4294901760
        %v801 = vsub.f32 %v354, %v800
        %v802 = vand.u32 %v801, 4294901760
        %803 = vmatpush1.xpose.msra.mxu0 %v802
        %804 = vmatprep.subr.mxu0 0.0
        %v805 = vand.u32 %v351, 4294901760
        %v806 = vsub.f32 %v351, %v805
        %v807 = vand.u32 %v806, 4294901760
        %808 = vmatpush1.xpose.msra.mxu0 %v807
        %809 = vmatprep.subr.mxu0 0.0
        %v810 = vand.u32 %v348, 4294901760
        %v811 = vsub.f32 %v348, %v810
        %v812 = vand.u32 %v811, 4294901760
        %813 = vmatpush1.xpose.msra.mxu0 %v812
        %814 = vmatprep.subr.mxu0 0.0
        %v815 = vand.u32 %v345, 4294901760
        %v816 = vsub.f32 %v345, %v815
        %v817 = vand.u32 %v816, 4294901760
        %818 = vmatpush1.xpose.msra.mxu0 %v817
        %819 = vmatprep.subr.mxu0 0.0
        %v820 = vand.u32 %v342, 4294901760
        %v821 = vsub.f32 %v342, %v820
        %v822 = vand.u32 %v821, 4294901760
        %823 = vmatpush1.xpose.msra.mxu0 %v822
        %824 = vmatprep.subr.mxu0 0.0
        %v825 = vand.u32 %v339, 4294901760
        %v826 = vsub.f32 %v339, %v825
        %v827 = vand.u32 %v826, 4294901760
        %828 = vmatpush1.xpose.msra.mxu0 %v827
        %829 = vmatprep.subr.mxu0 0.0
        %v830 = vand.u32 %v336, 4294901760
        %v831 = vsub.f32 %v336, %v830
        %v832 = vand.u32 %v831, 4294901760
        %833 = vmatpush1.xpose.msra.mxu0 %v832
        %834 = vmatprep.subr.mxu0 0.0
        %v835 = vand.u32 %v333, 4294901760
        %v836 = vsub.f32 %v333, %v835
        %v837 = vand.u32 %v836, 4294901760
        %838 = vmatpush1.xpose.msra.mxu0 %v837
        %839 = vmatprep.subr.mxu0 0.0
        %v840 = vand.u32 %v330, 4294901760
        %v841 = vsub.f32 %v330, %v840
        %v842 = vand.u32 %v841, 4294901760
        %843 = vmatpush1.xpose.msra.mxu0 %v842
        %844 = vmatprep.subr.mxu0 0.0
        %v845 = vand.u32 %v327, 4294901760
        %v846 = vsub.f32 %v327, %v845
        %v847 = vand.u32 %v846, 4294901760
        %848 = vmatpush1.xpose.msra.mxu0 %v847
        %849 = vmatprep.subr.mxu0 0.0
        %v850 = vand.u32 %v324, 4294901760
        %v851 = vsub.f32 %v324, %v850
        %v852 = vand.u32 %v851, 4294901760
        %853 = vmatpush1.xpose.msra.mxu0 %v852
        %854 = vmatprep.subr.mxu0 0.0
        %v855 = vand.u32 %v321, 4294901760
        %v856 = vsub.f32 %v321, %v855
        %v857 = vand.u32 %v856, 4294901760
        %858 = vmatpush1.xpose.msra.mxu0 %v857
        %859 = vmatprep.subr.mxu0 0.0
        %v860 = vand.u32 %v318, 4294901760
        %v861 = vsub.f32 %v318, %v860
        %v862 = vand.u32 %v861, 4294901760
        %863 = vmatpush1.xpose.msra.mxu0 %v862
        %864 = vmatprep.subr.mxu0 0.0
        %v865 = vand.u32 %v315, 4294901760
        %v866 = vsub.f32 %v315, %v865
        %v867 = vand.u32 %v866, 4294901760
        %868 = vmatpush1.xpose.msra.mxu0 %v867
        %869 = vmatprep.subr.mxu0 0.0
        %v870 = vand.u32 %v312, 4294901760
        %v871 = vsub.f32 %v312, %v870
        %v872 = vand.u32 %v871, 4294901760
        %873 = vmatpush1.xpose.msra.mxu0 %v872
        %874 = vmatprep.subr.mxu0 0.0
        %875 = vmatpush2.xpose.msra.mxu0 0.0
        %876 = vmatprep.subr.mxu0 0.0
        %877 = vmatpush2.xpose.msra.mxu0 0.0
        %878 = vmatprep.subr.mxu0 0.0
        %879 = vmatpush2.xpose.msra.mxu0 0.0
        %880 = vmatprep.subr.mxu0 0.0
        %881 = vmatpush2.xpose.msra.mxu0 0.0
        %882 = vmatprep.subr.mxu0 0.0
        %883 = vmatpush2.xpose.msra.mxu0 0.0
        %884 = vmatprep.subr.mxu0 0.0
        %885 = vmatpush2.xpose.msra.mxu0 0.0
        %886 = vmatprep.subr.mxu0 0.0
        %887 = vmatpush2.xpose.msra.mxu0 0.0
        %888 = vmatprep.subr.mxu0 0.0
        %889 = vmatpush2.xpose.msra.mxu0 0.0
        %890 = vmatprep.subr.mxu0 0.0
        %891 = vmatpush2.xpose.msra.mxu0 0.0
        %892 = vmatprep.subr.mxu0 0.0
        %893 = vmatpush2.xpose.msra.mxu0 0.0
        %894 = vmatprep.subr.mxu0 0.0
        %895 = vmatpush2.xpose.msra.mxu0 0.0
        %896 = vmatprep.subr.mxu0 0.0
        %897 = vmatpush2.xpose.msra.mxu0 0.0
        %898 = vmatprep.subr.mxu0 0.0
        %899 = vmatpush2.xpose.msra.mxu0 0.0
        %900 = vmatprep.subr.mxu0 0.0
        %901 = vmatpush2.xpose.msra.mxu0 0.0
        %902 = vmatprep.subr.mxu0 0.0
        %903 = vmatpush2.xpose.msra.mxu0 0.0
        %904 = vmatprep.subr.mxu0 0.0
        %905 = vmatpush2.xpose.msra.mxu0 0.0
        %906 = vmatprep.mubr.f32.mxu0 0.0
        %v907 = vand.u32 %v309, 4294901760
        %908 = vmatmul.mubr.f32.gmra.mxu0 %v907
        %v909 = vpop.f32.mrf.mxu0
        %v910 = vadd.f32 %v791, %v909
        %v911 = vpop.f32.mrf.mxu0
        %912 = vdwg.mxu0
        %913 = vmatprep.subr.mxu0 0.0
        %v914 = vand.u32 %v357, 4294901760
        %915 = vmatpush1.xpose.msra.mxu0 %v914
        %916 = vmatprep.subr.mxu0 0.0
        %v917 = vand.u32 %v354, 4294901760
        %918 = vmatpush1.xpose.msra.mxu0 %v917
        %919 = vmatprep.subr.mxu0 0.0
        %v920 = vand.u32 %v351, 4294901760
        %921 = vmatpush1.xpose.msra.mxu0 %v920
        %922 = vmatprep.subr.mxu0 0.0
        %v923 = vand.u32 %v348, 4294901760
        %924 = vmatpush1.xpose.msra.mxu0 %v923
        %925 = vmatprep.subr.mxu0 0.0
        %v926 = vand.u32 %v345, 4294901760
        %927 = vmatpush1.xpose.msra.mxu0 %v926
        %928 = vmatprep.subr.mxu0 0.0
        %v929 = vand.u32 %v342, 4294901760
        %930 = vmatpush1.xpose.msra.mxu0 %v929
        %931 = vmatprep.subr.mxu0 0.0
        %v932 = vand.u32 %v339, 4294901760
        %933 = vmatpush1.xpose.msra.mxu0 %v932
        %934 = vmatprep.subr.mxu0 0.0
        %v935 = vand.u32 %v336, 4294901760
        %936 = vmatpush1.xpose.msra.mxu0 %v935
        %937 = vmatprep.subr.mxu0 0.0
        %v938 = vand.u32 %v333, 4294901760
        %939 = vmatpush1.xpose.msra.mxu0 %v938
        %940 = vmatprep.subr.mxu0 0.0
        %v941 = vand.u32 %v330, 4294901760
        %942 = vmatpush1.xpose.msra.mxu0 %v941
        %943 = vmatprep.subr.mxu0 0.0
        %v944 = vand.u32 %v327, 4294901760
        %945 = vmatpush1.xpose.msra.mxu0 %v944
        %946 = vmatprep.subr.mxu0 0.0
        %v947 = vand.u32 %v324, 4294901760
        %948 = vmatpush1.xpose.msra.mxu0 %v947
        %949 = vmatprep.subr.mxu0 0.0
        %v950 = vand.u32 %v321, 4294901760
        %951 = vmatpush1.xpose.msra.mxu0 %v950
        %952 = vmatprep.subr.mxu0 0.0
        %v953 = vand.u32 %v318, 4294901760
        %954 = vmatpush1.xpose.msra.mxu0 %v953
        %955 = vmatprep.subr.mxu0 0.0
        %v956 = vand.u32 %v315, 4294901760
        %957 = vmatpush1.xpose.msra.mxu0 %v956
        %958 = vmatprep.subr.mxu0 0.0
        %v959 = vand.u32 %v312, 4294901760
        %960 = vmatpush1.xpose.msra.mxu0 %v959
        %961 = vmatprep.subr.mxu0 0.0
        %962 = vmatpush2.xpose.msra.mxu0 0.0
        %963 = vmatprep.subr.mxu0 0.0
        %964 = vmatpush2.xpose.msra.mxu0 0.0
        %965 = vmatprep.subr.mxu0 0.0
        %966 = vmatpush2.xpose.msra.mxu0 0.0
        %967 = vmatprep.subr.mxu0 0.0
        %968 = vmatpush2.xpose.msra.mxu0 0.0
        %969 = vmatprep.subr.mxu0 0.0
        %970 = vmatpush2.xpose.msra.mxu0 0.0
        %971 = vmatprep.subr.mxu0 0.0
        %972 = vmatpush2.xpose.msra.mxu0 0.0
        %973 = vmatprep.subr.mxu0 0.0
        %974 = vmatpush2.xpose.msra.mxu0 0.0
        %975 = vmatprep.subr.mxu0 0.0
        %976 = vmatpush2.xpose.msra.mxu0 0.0
        %977 = vmatprep.subr.mxu0 0.0
        %978 = vmatpush2.xpose.msra.mxu0 0.0
        %979 = vmatprep.subr.mxu0 0.0
        %980 = vmatpush2.xpose.msra.mxu0 0.0
        %981 = vmatprep.subr.mxu0 0.0
        %982 = vmatpush2.xpose.msra.mxu0 0.0
        %983 = vmatprep.subr.mxu0 0.0
        %984 = vmatpush2.xpose.msra.mxu0 0.0
        %985 = vmatprep.subr.mxu0 0.0
        %986 = vmatpush2.xpose.msra.mxu0 0.0
        %987 = vmatprep.subr.mxu0 0.0
        %988 = vmatpush2.xpose.msra.mxu0 0.0
        %989 = vmatprep.subr.mxu0 0.0
        %990 = vmatpush2.xpose.msra.mxu0 0.0
        %991 = vmatprep.subr.mxu0 0.0
        %992 = vmatpush2.xpose.msra.mxu0 0.0
        %993 = vmatprep.mubr.f32.mxu0 0.0
        %v994 = vand.u32 %v309, 4294901760
        %995 = vmatmul.mubr.f32.gmra.mxu0 %v994
        %v996 = vpop.f32.mrf.mxu0
        %v997 = vadd.f32 %v910, %v996
        %v998 = vpop.f32.mrf.mxu0
        %999 = vdwg.mxu0
        %v1000 = vld [vmem:[%s0] sm:$0xff]
        %s1001 = smul.u32 %s17, 128
        %v1002 = vlaneseq
        %v1003 = vand.u32 %v1002, 127
        %v1004 = vstv %s1001
        %v1005 = vadd.s32 %v1004, %v1003
        %1006 = vset.pattern.permute.xlu0 0
        %1007 = vperm.xlu0 %1006, %v1000
        %v1008 = vpop.permute.xlu0 %1007
        %vm1009 = vcmp.eq.s32.totalorder %v1005, %v1008
        %v1010 = vsel %vm1009, %v997, 0.0
        %1011 = vadd.xlane.f32.xlu0 %v1010
        %v1012 = vpop.xlane.xlu0 %1011
        %v1013 = vmul.f32 %v1012, %v1012
        %v1014 = vsub.f32 1.0, %v1013
        %v1015 = vmax.f32 %v1014, 0.0
        %v1016 = vrsqrt.pop %v1015
        %v1017 = vmul.f32 %v1015, %v1016
        %vm1018 = vcmp.eq.f32.partialorder %v1015, inf
        %v1019 = vsel %vm1018, %v1015, %v1017
        %vm1020 = vcmp.eq.f32.partialorder %v1015, 0.0
        %v1021 = vand.u32 %v1015, 2147483648
        %v1022 = vsel %vm1020, %v1021, %v1019
        %v1023 = vmul.f32 %v1012, 0.87758255
        %v1024 = vmul.f32 %v1022, 0.47942555
        %v1025 = vsub.f32 %v1023, %v1024
        %vm1026 = vcmp.gt.f32.partialorder %v1012, -0.87758255
        %v1027 = vsub.f32 %v1012, 0.23971277
        %v1028 = vsel %vm1026, %v1025, %v1027
        %v1029 = vsel %vm1009, %v1028, %v997
        %v1030 = vmul.f32 %v1029, 30.0
        %1031 = vst [vmem:[%s164] sm:$0xff] %v1030
        %s1032 = sand.u32 %s93, 1
        %s1033 = scalar_lea.sflag [#allocation3], %s1032
        %s1034 = sand.u32 %s93, 1
        %s1035 = smul.addr %s1034, 8
        %s1036 = scalar_lea.vmem [#allocation2], %s1035
        // Predicated region
        $region33: #{tpu_custom_call.1} parent=31 // pred_check
          %p1037 = pneg %p103
        $region34: #{tpu_custom_call.1} parent=31 // pred_check_branch
          %1039 = sbr.rel (%p1037) target = $region36
        $region35: #{tpu_custom_call.1} parent=31 // pred_region
          %s1041 = ssub.s32 128, 128
          %1042 = vsyncadd %s1033, %s1041
          %s1043 = smul.addr %s17, 128
          %s1044 = scalar_lea.hbm %s3, %s1043
          %s1046 = sshll.u32 %s1036, 4
          %s1047 = int_to_ptr.vmem [resolvable:$true] %s1046
          %1049 = dma.vmem_to_hbm [thread:$0]  %s1047, 128, %s1044, %s1033
        $region36: #{tpu_custom_call.1} parent=31 // pred_fallthru
          _
      $region32: #{tpu_custom_call.1} parent=5 // pred_fallthru
        _
      %p1050 = scmp.le.s32.totalorder 2, %s12
      // Predicated region
      $region37: #{tpu_custom_call.1} parent=5 // pred_check
        %p1051 = pneg %p1050
      $region38: #{tpu_custom_call.1} parent=5 // pred_check_branch
        %1053 = sbr.rel (%p1051) target = $region40
      $region39: #{tpu_custom_call.1} parent=5 // pred_region
        %s1054 = ssub.s32 %s12, 2
        // Predicated region
        $region41: #{tpu_custom_call.1} parent=39 // pred_check
          %p1055 = pneg %p109
        $region42: #{tpu_custom_call.1} parent=39 // pred_check_branch
          %1057 = sbr.rel (%p1055) target = $region44
        $region43: #{tpu_custom_call.1} parent=39 // pred_region
          %s1058 = sand.u32 %s94, 1
          %s1059 = scalar_lea.sflag [#allocation3], %s1058
          %s1060 = sand.u32 %s94, 1
          %s1061 = smul.addr %s1060, 8
          %s1062 = scalar_lea.vmem [#allocation2], %s1061
          %1063 = dma.done %s1059, 128
        $region44: #{tpu_custom_call.1} parent=39 // pred_fallthru
          _
      $region40: #{tpu_custom_call.1} parent=5 // pred_fallthru
        _
    $region6: #{tpu_custom_call.1} parent=1 // loop_footer
      %s16 = sadd.s32 1, %s12
    $region7: #{tpu_custom_call.1} parent=1 // loop_footer_branch
      %11 = sbr.rel target = $region3
    $region8: #{tpu_custom_call.1} parent=1 // loop_exit
      _
    %1064 = vsyncpa [#allocation3], 1
    %s1065 = scalar_lea.sflag [#allocation3], 1
    %1066 = vsyncpa %s1065, 1

</llo_original>
